<compile_context>
chip_gen: v6e
topology: v6e:2x2x1
jax: 0.10.0
libtpu: 0.0.40
codegen_flags: <defaults>
</compile_context>

<pallas_src>
import math
import functools

import jax
import jax.numpy as jnp
from jax.experimental import pallas as pl
from jax.experimental.pallas import tpu as pltpu


def _cls_head_kernel(hs_ref, mask_ref, w_ref, out_ref, *, hidden, activation):
    # hs_ref:   (tb, S, H)     mask_ref: (tb, S, 1)
    # w_ref:    (n, 2H + 1)    -- PyTorch layout (out_features, in_features),
    #                             bias packed as the last column.
    # out_ref:  (tb, n)
    H = hidden
    n = out_ref.shape[-1]

    # f32 everywhere for the pooling path, regardless of input dtype.
    hs = hs_ref[...].astype(jnp.float32)             # (tb, S, H)
    mask = mask_ref[...].astype(jnp.float32)         # (tb, S, 1)

    # CLS token (first sequence position).
    cls_tok = hs[:, 0, :]                             # (tb, H)

    # Masked mean pooling over the sequence axis (S = sublane reduce).
    masked = hs * mask                                 # lane splat, no relayout
    sum_emb = jnp.sum(masked, axis=1)                  # (tb, H)
    sum_mask = jnp.maximum(jnp.sum(mask, axis=1), 1e-9)  # (tb, 1), f32 count
    mean_emb = sum_emb / sum_mask                      # (tb, H)

    # Static slices of the packed dense parameters (free).
    w = w_ref[...].astype(jnp.float32)                 # (n, 2H+1)
    wc = w[:, 0:H]                                     # (n, H) acts on CLS
    wm = w[:, H:2 * H]                                 # (n, H) acts on mean
    b = w[:, 2 * H:2 * H + 1]                          # (n, 1) bias

    if n == 1:
        # K=H, N=1 dense: VPU multiply + XLU lane reduce, no MXU round trips.
        logits = (jnp.sum(cls_tok * wc + mean_emb * wm, axis=-1, keepdims=True)
                  + b)                                 # (tb, 1)
    else:
        # Larger heads: MXU, contracting the feature axis of both operands
        # (i.e. x @ W^T with W in its native PyTorch layout).
        dn = (((1,), (1,)), ((), ()))
        logits = (jax.lax.dot_general(cls_tok, wc, dn,
                                      preferred_element_type=jnp.float32)
                  + jax.lax.dot_general(mean_emb, wm, dn,
                                        preferred_element_type=jnp.float32)
                  + b.T)                               # (tb, n)

    if activation == "sigmoid":
        out = jax.nn.sigmoid(logits)                   # EUP path
    elif activation == "tanh":
        out = jnp.tanh(logits)
    elif activation == "relu":
        out = jnp.maximum(logits, 0.0)
    else:                                              # 'none'
        out = logits

    out_ref[...] = out.astype(out_ref.dtype)           # single dense store


def pack_dense_params(dense_weight, dense_bias):
    """Pack nn.Linear params once at model-load time.

    dense_weight: (n_classes, 2H) -- native PyTorch nn.Linear layout.
    dense_bias:   (n_classes,)
    Returns (n_classes, 2H + 1) with the bias as the last column.
    """
    return jnp.concatenate([dense_weight, dense_bias[:, None]], axis=-1)


def bert_generic_classification_head(hidden_states, attention_mask,
                                     packed_params, *, activation="sigmoid"):
    """hidden_states: (B, S, H); attention_mask: (B, S) (0/1);
    packed_params: (n_classes, 2H + 1) from `pack_dense_params`."""
    B, S, H = hidden_states.shape
    n_classes, packed_cols = packed_params.shape
    if packed_cols != 2 * H + 1:
        raise ValueError(
            f"packed_params must have shape (n_classes, 2*H+1) = (*, {2*H+1}); "
            f"got {packed_params.shape}")
    if attention_mask.shape != (B, S):
        raise ValueError(f"attention_mask must be (B, S)={B, S}; "
                         f"got {attention_mask.shape}")

    # Metadata-only reshape so the in-kernel broadcast is a lane splat.
    mask3 = attention_mask.reshape(B, S, 1)

    # Batch tile: parallel grid axis (both TCs on v7x at realistic batch
    # sizes).  Keep the output block sublane-legal: tb == B or a multiple of 8.
    if B > 8 and B % 8 == 0:
        tb = 8
    else:
        tb = B
    grid = (B // tb,)

    kernel = functools.partial(_cls_head_kernel, hidden=H,
                               activation=activation)

    return pl.pallas_call(
        kernel,
        out_shape=jax.ShapeDtypeStruct((B, n_classes), hidden_states.dtype),
        grid=grid,
        in_specs=[
            pl.BlockSpec((tb, S, H), lambda i: (i, 0, 0)),
            pl.BlockSpec((tb, S, 1), lambda i: (i, 0, 0)),
            pl.BlockSpec((n_classes, 2 * H + 1), lambda i: (0, 0)),
        ],
        out_specs=pl.BlockSpec((tb, n_classes), lambda i: (i, 0)),
        compiler_params=pltpu.CompilerParams(
            dimension_semantics=("parallel",)),
    )(hidden_states, mask3, packed_params)


def _reference(hidden_states, attention_mask, dense_weight, dense_bias,
               *, activation="sigmoid"):
    # dense_weight in native PyTorch layout (n_classes, 2H).
    first = hidden_states[:, 0].astype(jnp.float32)                # (B, H)
    m = attention_mask.astype(jnp.float32)[:, :, None]
    m = jnp.broadcast_to(m, hidden_states.shape)                   # (B, S, H)
    sum_emb = jnp.sum(hidden_states.astype(jnp.float32) * m, axis=1)
    sum_mask = jnp.maximum(jnp.sum(m, axis=1), 1e-9)
    mean = sum_emb / sum_mask
    pooled = jnp.concatenate([first, mean], axis=1)                # (B, 2H)
    logits = pooled @ dense_weight.T.astype(jnp.float32) + dense_bias
    if activation == "sigmoid":
        return jax.nn.sigmoid(logits)
    if activation == "tanh":
        return jnp.tanh(logits)
    if activation == "relu":
        return jax.nn.relu(logits)
    return logits


if __name__ == "__main__":
    # Config analogue: hidden_size=32, seq=8, batch=2, n_classes=1, sigmoid.
    B, S, H = 2, 8, 32
    n_classes = 1
    activation = "sigmoid"

    key = jax.random.PRNGKey(0)
    k1, k2, k3 = jax.random.split(key, 3)

    hidden_states = jax.random.normal(k1, (B, S, H), jnp.float32)

    # 0/1 attention mask; last 3 positions of batch 1 are padding.
    attention_mask = jnp.ones((B, S), jnp.float32)
    attention_mask = attention_mask.at[1, -3:].set(0.0)

    bound = 1.0 / math.sqrt(2 * H)
    # Native PyTorch nn.Linear layout: weight (n_classes, 2H), bias (n_classes,)
    dense_weight = jax.random.uniform(k2, (n_classes, 2 * H), jnp.float32,
                                      -bound, bound)
    dense_bias = jax.random.uniform(k3, (n_classes,), jnp.float32,
                                    -bound, bound)

    # Done ONCE at model-load time (not per forward call).
    packed_params = pack_dense_params(dense_weight, dense_bias)

    out = bert_generic_classification_head(
        hidden_states, attention_mask, packed_params, activation=activation)
    out = jax.block_until_ready(out)

    ref = _reference(hidden_states, attention_mask, dense_weight, dense_bias,
                     activation=activation)
    assert out.shape == (B, n_classes)
    assert jnp.allclose(out, ref, atol=1e-5, rtol=1e-5), "mismatch vs reference"

    print("KERNEL_OK")
</pallas_src>

<mosaic_0001>
module attributes {stable_mosaic.version = 11 : i64} {
  func.func @_cls_head_kernel(%arg0: i32, %arg1: memref<2x8x32xf32, #tpu.memory_space<vmem>>, %arg2: memref<2x8x1xf32, #tpu.memory_space<vmem>>, %arg3: memref<1x65xf32, #tpu.memory_space<vmem>>, %arg4: memref<2x1xf32, #tpu.memory_space<vmem>>) attributes {dimension_semantics = [#tpu.dimension_semantics<parallel>], iteration_bounds = array<i64: 1>, scalar_prefetch = 0 : i64, scratch_operands = 0 : i64, tpu.core_type = #tpu.core_type<tc>, window_params = [{transform_indices = @transform_0, window_bounds = array<i64: 2, 8, 32>}, {transform_indices = @transform_1, window_bounds = array<i64: 2, 8, 1>}, {pipeline_mode = #tpu.pipeline_mode<synchronous>, transform_indices = @transform_2, window_bounds = array<i64: 1, 65>}, {transform_indices = @transform_3, window_bounds = array<i64: 2, 1>}]} {
    %c0 = arith.constant 0 : index
    %c0_0 = arith.constant 0 : index
    %c0_1 = arith.constant 0 : index
    %0 = vector.load %arg1[%c0, %c0_0, %c0_1] : memref<2x8x32xf32, #tpu.memory_space<vmem>>, vector<2x8x32xf32>
    %c0_2 = arith.constant 0 : index
    %c0_3 = arith.constant 0 : index
    %c0_4 = arith.constant 0 : index
    %1 = vector.load %arg2[%c0_2, %c0_3, %c0_4] : memref<2x8x1xf32, #tpu.memory_space<vmem>>, vector<2x8x1xf32>
    %2 = vector.extract_strided_slice %0 {offsets = [0, 0, 0], sizes = [2, 1, 32], strides = [1, 1, 1]} : vector<2x8x32xf32> to vector<2x1x32xf32>
    %3 = vector.shape_cast %2 : vector<2x1x32xf32> to vector<2x32xf32>
    %4 = vector.broadcast %1 : vector<2x8x1xf32> to vector<2x8x32xf32>
    %5 = arith.mulf %0, %4 : vector<2x8x32xf32>
    %cst = arith.constant dense<0.000000e+00> : vector<2x32xf32>
    %6 = vector.multi_reduction <add>, %5, %cst [1] : vector<2x8x32xf32> to vector<2x32xf32>
    %cst_5 = arith.constant dense<0.000000e+00> : vector<2x1xf32>
    %7 = vector.multi_reduction <add>, %1, %cst_5 [1] : vector<2x8x1xf32> to vector<2x1xf32>
    %cst_6 = arith.constant 9.99999971E-10 : f32
    %8 = vector.broadcast %cst_6 : f32 to vector<2x1xf32>
    %9 = arith.maximumf %7, %8 : vector<2x1xf32>
    %10 = vector.broadcast %9 : vector<2x1xf32> to vector<2x32xf32>
    %11 = arith.divf %6, %10 : vector<2x32xf32>
    %c0_7 = arith.constant 0 : index
    %c0_8 = arith.constant 0 : index
    %12 = vector.load %arg3[%c0_7, %c0_8] : memref<1x65xf32, #tpu.memory_space<vmem>>, vector<1x65xf32>
    %13 = vector.extract_strided_slice %12 {offsets = [0, 0], sizes = [1, 32], strides = [1, 1]} : vector<1x65xf32> to vector<1x32xf32>
    %14 = vector.extract_strided_slice %12 {offsets = [0, 32], sizes = [1, 32], strides = [1, 1]} : vector<1x65xf32> to vector<1x32xf32>
    %15 = vector.extract_strided_slice %12 {offsets = [0, 64], sizes = [1, 1], strides = [1, 1]} : vector<1x65xf32> to vector<1x1xf32>
    %16 = vector.broadcast %13 : vector<1x32xf32> to vector<2x32xf32>
    %17 = arith.mulf %3, %16 : vector<2x32xf32>
    %18 = vector.broadcast %14 : vector<1x32xf32> to vector<2x32xf32>
    %19 = arith.mulf %11, %18 : vector<2x32xf32>
    %20 = arith.addf %17, %19 : vector<2x32xf32>
    %cst_9 = arith.constant dense<0.000000e+00> : vector<2xf32>
    %21 = vector.multi_reduction <add>, %20, %cst_9 [1] : vector<2x32xf32> to vector<2xf32>
    %22 = vector.shape_cast %21 : vector<2xf32> to vector<2x1xf32>
    %23 = vector.broadcast %15 : vector<1x1xf32> to vector<2x1xf32>
    %24 = arith.addf %22, %23 : vector<2x1xf32>
    %25 = arith.negf %24 : vector<2x1xf32>
    %26 = math.exp %25 : vector<2x1xf32>
    %cst_10 = arith.constant 1.000000e+00 : f32
    %27 = vector.broadcast %cst_10 : f32 to vector<2x1xf32>
    %28 = arith.addf %27, %26 : vector<2x1xf32>
    %29 = arith.divf %27, %28 : vector<2x1xf32>
    %c0_11 = arith.constant 0 : index
    %c0_12 = arith.constant 0 : index
    %30 = vector.load %arg4[%c0_11, %c0_12] : memref<2x1xf32, #tpu.memory_space<vmem>>, vector<2x1xf32>
    tpu.vector_store %arg4[%c0_11, %c0_12], %29 {strides = array<i32>} : memref<2x1xf32, #tpu.memory_space<vmem>>, vector<2x1xf32>,
    return
  }
  func.func @transform_0(%arg0: i32) -> (i32, i32, i32) {
    %c0_i32 = arith.constant 0 : i32
    %c0_i32_0 = arith.constant 0 : i32
    %c0_i32_1 = arith.constant 0 : i32
    return %arg0, %c0_i32, %c0_i32_0 : i32, i32, i32
  }
  func.func @transform_1(%arg0: i32) -> (i32, i32, i32) {
    %c0_i32 = arith.constant 0 : i32
    %c0_i32_0 = arith.constant 0 : i32
    %c0_i32_1 = arith.constant 0 : i32
    return %arg0, %c0_i32, %c0_i32_0 : i32, i32, i32
  }
  func.func @transform_2(%arg0: i32) -> (i32, i32) {
    %c0_i32 = arith.constant 0 : i32
    %c0_i32_0 = arith.constant 0 : i32
    %c0_i32_1 = arith.constant 0 : i32
    return %c0_i32, %c0_i32_0 : i32, i32
  }
  func.func @transform_3(%arg0: i32) -> (i32, i32) {
    %c0_i32 = arith.constant 0 : i32
    %c0_i32_0 = arith.constant 0 : i32
    return %arg0, %c0_i32 : i32, i32
  }
}

</mosaic_0001>

<llo_original>
// kernel: tpu_custom_call.1
$region0: #{tpu_custom_call.1}
  #allocation0 [shape = 'u32[]', space=smem, size = 0x4, offset = 0x4, fixed_abs, tag = 'smem constant byte address 0x4 - core index']
  #allocation1 [shape = 'u32[144,128]{1,0:T(1,128)}', space=vmem, size = 0x12000, scoped, tag = 'internal scratch']
  %s0 = inlined_call_operand.vmem [shape: f32[2,8,32], index: 0, kind: input, shape index: {}]
  %s1 = inlined_call_operand.vmem [shape: f32[2,8,1], index: 1, kind: input, shape index: {}]
  %s2 = inlined_call_operand.vmem [shape: f32[1,65], index: 2, kind: input, shape index: {}]
  %s3 = inlined_call_operand.vmem [shape: f32[2,1], index: 3, kind: output, shape index: {}]
  %s4 = sld [smem:[#allocation0]]
  $region22: #{tpu_custom_call.1} parent=0
    _
  %s6 = ssub.s32 1, %s4
  %s7 = scalar_select 0, %s6, %s4
  // Predicated region
  $region2: #{tpu_custom_call.1} parent=0 // pred_check
    _
  $region3: #{tpu_custom_call.1} parent=0 // pred_check_branch
    %9 = sbr.rel (0) target = $region5
  $region4: #{tpu_custom_call.1} parent=0 // pred_region
    _
  $region5: #{tpu_custom_call.1} parent=0 // pred_fallthru
    _
  // Predicated region
  $region6: #{tpu_custom_call.1} parent=0 // pred_check
    _
  $region7: #{tpu_custom_call.1} parent=0 // pred_check_branch
    %11 = sbr.rel (0) target = $region9
  $region8: #{tpu_custom_call.1} parent=0 // pred_region
    _
  $region9: #{tpu_custom_call.1} parent=0 // pred_fallthru
    _
  // Predicated region
  $region10: #{tpu_custom_call.1} parent=0 // pred_check
    _
  $region11: #{tpu_custom_call.1} parent=0 // pred_check_branch
    %13 = sbr.rel (0) target = $region13
  $region12: #{tpu_custom_call.1} parent=0 // pred_region
    _
  $region13: #{tpu_custom_call.1} parent=0 // pred_fallthru
    _
  %v14 = vld [vmem:[%s0] sm:$0xff]
  %v15 = vld [vmem:[%s0 + $0x8] sm:$0xff]
  %v16 = vld [vmem:[%s1] sm:$0xff]
  %v17 = vld [vmem:[%s1 + $0x8] sm:$0xff]
  %19 = vset.pattern.permute.xlu0 0
  %20 = vperm.xlu0 %19, %v16
  %v21 = vpop.permute.xlu0 %20
  %24 = vset.pattern.permute.xlu0 0
  %25 = vperm.xlu0 %24, %v17
  %v26 = vpop.permute.xlu0 %25
  %v28 = vmul.f32 %v14, %v21
  %v29 = vmul.f32 %v15, %v26
  %vm30 = vcmask 261120
  %v31 = vsel %vm30, %v28, 0.0
  %v32 = vrot.slane %v31, 4
  %v33 = vadd.f32 %v31, %v32
  %v34 = vrot.slane %v33, 2
  %v35 = vadd.f32 %v33, %v34
  %v36 = vrot.slane %v35, 1
  %v37 = vadd.f32 %v35, %v36
  %v38 = vsel %vm30, %v29, 0.0
  %v39 = vrot.slane %v38, 4
  %v40 = vadd.f32 %v38, %v39
  %v41 = vrot.slane %v40, 2
  %v42 = vadd.f32 %v40, %v41
  %v43 = vrot.slane %v42, 1
  %v44 = vadd.f32 %v42, %v43
  %vm45 = vcmask 7168
  %v46 = vsel %vm45, %v16, 0.0
  %v47 = vrot.slane %v46, 4
  %v48 = vadd.f32 %v46, %v47
  %v49 = vrot.slane %v48, 2
  %v50 = vadd.f32 %v48, %v49
  %v51 = vrot.slane %v50, 1
  %v52 = vadd.f32 %v50, %v51
  %v53 = vsel %vm45, %v17, 0.0
  %v54 = vrot.slane %v53, 4
  %v55 = vadd.f32 %v53, %v54
  %v56 = vrot.slane %v55, 2
  %v57 = vadd.f32 %v55, %v56
  %v58 = vrot.slane %v57, 1
  %v59 = vadd.f32 %v57, %v58
  %v60 = vmax.f32 %v52, 1e-09
  %v61 = vmax.f32 %v59, 1e-09
  %63 = vset.pattern.permute.xlu0 0
  %64 = vperm.xlu0 %63, %v60
  %v65 = vpop.permute.xlu0 %64
  %68 = vset.pattern.permute.xlu0 0
  %69 = vperm.xlu0 %68, %v61
  %v70 = vpop.permute.xlu0 %69
  %v72 = vrcp.pop %v65
  %v73 = vmul.f32 %v37, %v72
  %v74 = vrcp.pop %v70
  %v75 = vmul.f32 %v44, %v74
  %v76 = vld [vmem:[%s2] sm:$0x1]
  %v78 = vlaneseq
  %v79 = vshrl.u32 %v78, 7
  %v80 = vsub.s32 0, %v79
  %v81 = vrot.slane %v76, %v80
  %v83 = vmul.f32 %v14, %v81
  %v84 = vmul.f32 %v15, %v81
  %85 = vrot.lane.b32.xlu0 %v81, 96
  %v86 = vpop.permute.xlu0 %85
  %v88 = vmul.f32 %v73, %v86
  %v89 = vmul.f32 %v75, %v86
  %v90 = vadd.f32 %v83, %v88
  %v91 = vadd.f32 %v84, %v89
  %v94 = vrot.slane %v91, 7
  %vm95 = vcmask 1041409
  %v96 = vsel %vm95, %v94, %v90
  %vm98 = vcmask 254976
  %v99 = vsel %vm98, %v96, 0.0
  %100 = vadd.xlane.f32.xlu0 %v99
  %v101 = vpop.xlane.xlu0 %100
  %v102 = vadd.f32 %v101, %v81
  %v103 = vxor.u32 %v102, 2147483648
  %v104 = vmul.f32 %v103, 1.442695
  %v105 = vpow.pop %v104
  %v106 = vadd.f32 %v105, 1.0
  %v107 = vrcp.pop %v106
  %v108 = vmul.f32 1.0, %v107
  %110 = vrot.lane.b32.xlu0 %v108, 64
  %v111 = vpop.permute.xlu0 %110
  %vm113 = vcmask 1024
  %114 = vst.msk [vmem:[%s3] sm:$0x3] %vm113, %v111
  // Predicated region
  $region14: #{tpu_custom_call.1} parent=0 // pred_check
    _
  $region15: #{tpu_custom_call.1} parent=0 // pred_check_branch
    %116 = sbr.rel (0) target = $region17
  $region16: #{tpu_custom_call.1} parent=0 // pred_region
    _
  $region17: #{tpu_custom_call.1} parent=0 // pred_fallthru
    _
  // Predicated region
  $region18: #{tpu_custom_call.1} parent=0 // pred_check
    _
  $region19: #{tpu_custom_call.1} parent=0 // pred_check_branch
    %118 = sbr.rel (0) target = $region21
  $region20: #{tpu_custom_call.1} parent=0 // pred_region
    _
  $region21: #{tpu_custom_call.1} parent=0 // pred_fallthru
    _

</llo_original>
